<compile_context>
chip_gen: v5e
topology: v5e:2x2
jax: 0.10.0
libtpu: 0.0.40
codegen_flags: <defaults>
</compile_context>

<pallas_src>
import math
import functools

import jax
import jax.numpy as jnp
from jax.experimental import pallas as pl
from jax.experimental.pallas import tpu as pltpu


def _exp_normal_smearing_kernel(dist_ref, means_ref, betas_ref, out_ref, *,
                                cutoff_lower, cutoff_upper, alpha, exp_in_bf16):
    # dist_ref : (1, TILE_N)          float32  (edges on the lane axis)
    # means_ref: (NUM_RBF, 1)         float32
    # betas_ref: (NUM_RBF, 1)         float32
    # out_ref  : (NUM_RBF, TILE_N)    out dtype
    d = dist_ref[...]                                    # (1, TILE_N)
    means = means_ref[...]                               # (NUM_RBF, 1)
    betas = betas_ref[...]                               # (NUM_RBF, 1)

    # CosineCutoff(0, cutoff_upper):
    #   0.5 * (cos(d * pi / cutoff_upper) + 1) * (d < cutoff_upper)
    # NOTE: the '<' must stay strict — padded tail columns carry d == cutoff_upper
    # and rely on it to evaluate to exactly 0.
    cutoffs = 0.5 * (jnp.cos(d * (math.pi / cutoff_upper)) + 1.0)    # (1, TILE_N)
    cutoffs = jnp.where(d < cutoff_upper, cutoffs, 0.0)              # (1, TILE_N)

    # exp(-betas * (exp(alpha * (cutoff_lower - d)) - means)^2)
    e = jnp.exp(alpha * (cutoff_lower - d))              # (1, TILE_N)
    diff = e - means                                     # broadcast -> (NUM_RBF, TILE_N)
    arg = -betas * diff * diff                           # (NUM_RBF, TILE_N), f32
    if exp_in_bf16:
        # Only worthwhile on v6e/v7x (bf16 EUP); never enable on v5e.
        rbf = jnp.exp(arg.astype(jnp.bfloat16)).astype(jnp.float32)
    else:
        rbf = jnp.exp(arg)

    # f32 compute throughout; cast only on the store.
    out_ref[...] = (cutoffs * rbf).astype(out_ref.dtype)


def exp_normal_smearing(dist, means, betas, *,
                        cutoff_lower=0.0, cutoff_upper=5.0,
                        tile_n=16384, out_dtype=jnp.float32,
                        edge_major=False, exp_in_bf16=False):
    """Radial-basis smearing.

    dist: (N,) distances.  means/betas: (num_rbf,) parameters.

    Returns the native lane-dense layout (num_rbf, N) by default.
    Pass edge_major=True for the PyTorch module's (N, num_rbf) layout
    (costs one extra HBM read+write of the output).
    """
    n = dist.shape[0]
    num_rbf = means.shape[0]
    alpha = 5.0 / (cutoff_upper - cutoff_lower)

    # --- tile sizing --------------------------------------------------------
    lane = 128
    n_pad = pl.cdiv(n, lane) * lane
    # Keep at least 2 grid steps whenever possible so both v7x TensorCores get
    # work; cap the tile at `tile_n` edges otherwise.
    min_tiles = 2 if n_pad >= 2 * lane else 1
    num_tiles = max(pl.cdiv(n_pad, tile_n), min_tiles)
    tile_n = pl.cdiv(n_pad, num_tiles * lane) * lane
    n_pad = tile_n * num_tiles

    # --- inputs -------------------------------------------------------------
    # Pad distances with cutoff_upper so padded columns evaluate to exactly 0
    # (d < cutoff_upper is False there); the tail is sliced off on return.
    dist_row = jnp.pad(dist.astype(jnp.float32), (0, n_pad - n),
                       constant_values=float(cutoff_upper)).reshape(1, n_pad)
    means_col = means.astype(jnp.float32).reshape(num_rbf, 1)
    betas_col = betas.astype(jnp.float32).reshape(num_rbf, 1)

    kernel = functools.partial(
        _exp_normal_smearing_kernel,
        cutoff_lower=float(cutoff_lower),
        cutoff_upper=float(cutoff_upper),
        alpha=float(alpha),
        exp_in_bf16=bool(exp_in_bf16),
    )

    # --- compiler params / cost hint ----------------------------------------
    out_bytes = jnp.dtype(out_dtype).itemsize
    # Double-buffered output block + double-buffered dist row + params.
    vmem_needed = 2 * (num_rbf * tile_n * out_bytes + tile_n * 4) + 4 * num_rbf * 4
    cp_kwargs = dict(dimension_semantics=("parallel",))
    if vmem_needed > 12 * 1024 * 1024:
        # v5e's default scoped VMEM is 16 MiB; give explicit headroom for big tiles.
        cp_kwargs["vmem_limit_bytes"] = int(vmem_needed + (4 << 20))

    cost = pl.CostEstimate(
        flops=int(n_pad * (4 * num_rbf + 6)),
        transcendentals=int(n_pad * (num_rbf + 2)),
        bytes_accessed=int(n_pad * 4 + num_rbf * n_pad * out_bytes + 2 * num_rbf * 4),
    )

    # --- kernel launch -------------------------------------------------------
    out_t = pl.pallas_call(
        kernel,
        out_shape=jax.ShapeDtypeStruct((num_rbf, n_pad), out_dtype),
        grid_spec=pltpu.PrefetchScalarGridSpec(
            num_scalar_prefetch=0,
            grid=(num_tiles,),
            in_specs=[
                pl.BlockSpec((1, tile_n), lambda i: (0, i)),        # contiguous row DMA
                pl.BlockSpec((num_rbf, 1), lambda i: (0, 0)),
                pl.BlockSpec((num_rbf, 1), lambda i: (0, 0)),
            ],
            out_specs=pl.BlockSpec((num_rbf, tile_n), lambda i: (0, i)),
        ),
        compiler_params=pltpu.CompilerParams(**cp_kwargs),
        cost_estimate=cost,
    )(dist_row, means_col, betas_col)

    out_t = out_t[:, :n]                      # drop the padded tail (fuses into consumer)
    if edge_major:
        # TODO(synk): prefer consuming the native (num_rbf, N) layout and
        # folding this transpose into the downstream dot_general instead.
        return jnp.transpose(out_t)
    return out_t


def _initial_params(cutoff_lower, cutoff_upper, num_rbf):
    # Deterministic init matching ExpNormalSmearing._initial_params.
    start_value = jnp.exp(jnp.asarray(-cutoff_upper + cutoff_lower, jnp.float32))
    means = jnp.linspace(start_value, 1.0, num_rbf, dtype=jnp.float32)
    betas = jnp.full((num_rbf,),
                     (2.0 / num_rbf * (1.0 - start_value)) ** (-2),
                     dtype=jnp.float32)
    return means, betas


def _reference(dist, means, betas, cutoff_lower, cutoff_upper):
    # Pure-JAX reference matching the PyTorch forward: (N, num_rbf).
    alpha = 5.0 / (cutoff_upper - cutoff_lower)
    d = dist[:, None].astype(jnp.float32)
    # cutoff_fn is CosineCutoff(0, cutoff_upper) inside the module.
    cut = 0.5 * (jnp.cos(d * math.pi / cutoff_upper) + 1.0)
    cut = cut * (d < cutoff_upper).astype(jnp.float32)
    return cut * jnp.exp(-betas[None, :] *
                         (jnp.exp(alpha * (-d + cutoff_lower)) - means[None, :]) ** 2)


if __name__ == "__main__":
    cutoff_lower = 0.0
    cutoff_upper = 5.0
    num_rbf = 50
    n_edges = 300          # not a multiple of 128: exercises tail padding/slicing

    key = jax.random.PRNGKey(0)
    # distances in [0, 6): exercises the cutoff mask (some values > cutoff_upper)
    dist = jax.random.uniform(key, (n_edges,), dtype=jnp.float32,
                              minval=0.0, maxval=6.0)

    means, betas = _initial_params(cutoff_lower, cutoff_upper, num_rbf)
    ref = _reference(dist, means, betas, cutoff_lower, cutoff_upper)

    # Native lane-dense layout (num_rbf, N) — the recommended consumer layout.
    out_native = exp_normal_smearing(dist, means, betas,
                                     cutoff_lower=cutoff_lower,
                                     cutoff_upper=cutoff_upper)
    out_native = jax.block_until_ready(out_native)
    assert out_native.shape == (num_rbf, n_edges), out_native.shape
    assert jnp.allclose(out_native, ref.T, atol=1e-5, rtol=1e-5), \
        float(jnp.max(jnp.abs(out_native - ref.T)))

    # Module-exact layout (N, num_rbf).
    out = exp_normal_smearing(dist, means, betas,
                              cutoff_lower=cutoff_lower,
                              cutoff_upper=cutoff_upper,
                              edge_major=True)
    out = jax.block_until_ready(out)
    assert out.shape == (n_edges, num_rbf), out.shape
    assert jnp.allclose(out, ref, atol=1e-5, rtol=1e-5), \
        float(jnp.max(jnp.abs(out - ref)))

    print("KERNEL_OK")
</pallas_src>

<mosaic_0001>
module attributes {stable_mosaic.version = 11 : i64} {
  func.func @_exp_normal_smearing_kernel(%arg0: i32, %arg1: memref<1x256xf32, #tpu.memory_space<vmem>>, %arg2: memref<50x1xf32, #tpu.memory_space<vmem>>, %arg3: memref<50x1xf32, #tpu.memory_space<vmem>>, %arg4: memref<50x256xf32, #tpu.memory_space<vmem>>) attributes {dimension_semantics = [#tpu.dimension_semantics<parallel>], iteration_bounds = array<i64: 2>, scalar_prefetch = 0 : i64, scratch_operands = 0 : i64, tpu.core_type = #tpu.core_type<tc>, window_params = [{transform_indices = @transform_0, window_bounds = array<i64: 1, 256>}, {pipeline_mode = #tpu.pipeline_mode<synchronous>, transform_indices = @transform_1, window_bounds = array<i64: 50, 1>}, {pipeline_mode = #tpu.pipeline_mode<synchronous>, transform_indices = @transform_2, window_bounds = array<i64: 50, 1>}, {transform_indices = @transform_3, window_bounds = array<i64: 50, 256>}]} {
    %c0 = arith.constant 0 : index
    %c0_0 = arith.constant 0 : index
    %0 = vector.load %arg1[%c0, %c0_0] : memref<1x256xf32, #tpu.memory_space<vmem>>, vector<1x256xf32>
    %c0_1 = arith.constant 0 : index
    %c0_2 = arith.constant 0 : index
    %1 = vector.load %arg2[%c0_1, %c0_2] : memref<50x1xf32, #tpu.memory_space<vmem>>, vector<50x1xf32>
    %c0_3 = arith.constant 0 : index
    %c0_4 = arith.constant 0 : index
    %2 = vector.load %arg3[%c0_3, %c0_4] : memref<50x1xf32, #tpu.memory_space<vmem>>, vector<50x1xf32>
    %cst = arith.constant 0.628318548 : f32
    %3 = vector.broadcast %cst : f32 to vector<1x256xf32>
    %4 = arith.mulf %0, %3 : vector<1x256xf32>
    %5 = math.cos %4 : vector<1x256xf32>
    %cst_5 = arith.constant 1.000000e+00 : f32
    %6 = vector.broadcast %cst_5 : f32 to vector<1x256xf32>
    %7 = arith.addf %5, %6 : vector<1x256xf32>
    %cst_6 = arith.constant 5.000000e-01 : f32
    %8 = vector.broadcast %cst_6 : f32 to vector<1x256xf32>
    %9 = arith.mulf %8, %7 : vector<1x256xf32>
    %cst_7 = arith.constant 5.000000e+00 : f32
    %10 = vector.broadcast %cst_7 : f32 to vector<1x256xf32>
    %11 = arith.cmpf olt, %0, %10 : vector<1x256xf32>
    %cst_8 = arith.constant 0.000000e+00 : f32
    %12 = vector.broadcast %cst_8 : f32 to vector<1x256xf32>
    %13 = arith.select %11, %9, %12 : vector<1x256xi1>, vector<1x256xf32>
    %cst_9 = arith.constant 0.000000e+00 : f32
    %14 = vector.broadcast %cst_9 : f32 to vector<1x256xf32>
    %15 = arith.subf %14, %0 : vector<1x256xf32>
    %cst_10 = arith.constant 1.000000e+00 : f32
    %16 = vector.broadcast %cst_10 : f32 to vector<1x256xf32>
    %17 = arith.mulf %16, %15 : vector<1x256xf32>
    %18 = math.exp %17 : vector<1x256xf32>
    %19 = vector.broadcast %18 : vector<1x256xf32> to vector<50x256xf32>
    %20 = vector.broadcast %1 : vector<50x1xf32> to vector<50x256xf32>
    %21 = arith.subf %19, %20 : vector<50x256xf32>
    %cst_11 = arith.constant 0.000000e+00 : f32
    %22 = vector.broadcast %cst_11 : f32 to vector<50x1xf32>
    %23 = arith.subf %22, %2 : vector<50x1xf32>
    %24 = vector.broadcast %23 : vector<50x1xf32> to vector<50x256xf32>
    %25 = arith.mulf %24, %21 : vector<50x256xf32>
    %26 = arith.mulf %25, %21 : vector<50x256xf32>
    %27 = math.exp %26 : vector<50x256xf32>
    %28 = vector.broadcast %13 : vector<1x256xf32> to vector<50x256xf32>
    %29 = arith.mulf %28, %27 : vector<50x256xf32>
    %c0_12 = arith.constant 0 : index
    %c0_13 = arith.constant 0 : index
    %30 = vector.load %arg4[%c0_12, %c0_13] : memref<50x256xf32, #tpu.memory_space<vmem>>, vector<50x256xf32>
    tpu.vector_store %arg4[%c0_12, %c0_13], %29 {strides = array<i32>} : memref<50x256xf32, #tpu.memory_space<vmem>>, vector<50x256xf32>,
    return
  }
  func.func @transform_0(%arg0: i32) -> (i32, i32) {
    %c0_i32 = arith.constant 0 : i32
    %c0_i32_0 = arith.constant 0 : i32
    return %c0_i32, %arg0 : i32, i32
  }
  func.func @transform_1(%arg0: i32) -> (i32, i32) {
    %c0_i32 = arith.constant 0 : i32
    %c0_i32_0 = arith.constant 0 : i32
    %c0_i32_1 = arith.constant 0 : i32
    return %c0_i32, %c0_i32_0 : i32, i32
  }
  func.func @transform_2(%arg0: i32) -> (i32, i32) {
    %c0_i32 = arith.constant 0 : i32
    %c0_i32_0 = arith.constant 0 : i32
    %c0_i32_1 = arith.constant 0 : i32
    return %c0_i32, %c0_i32_0 : i32, i32
  }
  func.func @transform_3(%arg0: i32) -> (i32, i32) {
    %c0_i32 = arith.constant 0 : i32
    %c0_i32_0 = arith.constant 0 : i32
    return %c0_i32, %arg0 : i32, i32
  }
}

</mosaic_0001>

<llo_original>
// kernel: tpu_custom_call.1
$region0: #{tpu_custom_call.1}
  #allocation0 [shape = 'u32[]', space=smem, size = 0x4, offset = 0x4, fixed_abs, tag = 'smem constant byte address 0x4 - core index']
  #allocation1 [shape = 'u32[72,128]{1,0:T(1,128)}', space=vmem, size = 0x9000, scoped, tag = 'internal scratch']
  %s0 = inlined_call_operand.vmem [shape: f32[1,512], index: 0, kind: input, shape index: {}]
  %s1 = inlined_call_operand.vmem [shape: f32[50,1], index: 1, kind: input, shape index: {}]
  %s2 = inlined_call_operand.vmem [shape: f32[50,1], index: 2, kind: input, shape index: {}]
  %s3 = inlined_call_operand.hbm [shape: f32[50,512], index: 3, kind: output, shape index: {}]
  %s4 = sld [smem:[#allocation0]]
  $region45: #{tpu_custom_call.1} parent=0
    _
  %s6 = ssub.s32 1, %s4
  %s7 = scalar_select 0, %s6, %s4
  $region1: #{tpu_custom_call.1} parent=0
    #allocation2 [shape = 'u8[114688]{0}', space=vmem, size = 0x1c000, scoped, tag = 'output window, operand 0']
    #allocation3 [shape = 's32[2]{0}', space=sflag, size = 0x8, scoped, tag = 'scoped memory for tpu_custom_call.1']
    %8 = vsyncpa [#allocation3], 0
    %s9 = scalar_lea.sflag [#allocation3], 1
    %10 = vsyncpa %s9, 0
    loop: start=0, step=1, limit=4
    $region2: #{tpu_custom_call.1} parent=1 // loop_pre_header
      _
    $region3: #{tpu_custom_call.1} parent=1 // loop_header
      %s12 = sphi 0, %s16
      %p13 = scmp.ge.s32.totalorder %s12, 4
      %s22 = sphi 0, %s24
      %s25 = sphi 0, %s22
      %s26 = sphi 0, %s25
      %s42 = sphi 0, %s26
      %s46 = sphi 0, %s46
      %s48 = sphi 0, %s46
      %s49 = sphi 0, %s48
      %s63 = sphi 0, %s49
      %s67 = sphi 0, %s67
      %s69 = sphi 0, %s67
      %s70 = sphi 0, %s69
      %s84 = sphi 0, %s70
      %s90 = sphi 0, %s92
      %s93 = sphi 0, %s90
      %s94 = sphi 0, %s93
      %s110 = sphi 0, %s94
    $region4: #{tpu_custom_call.1} parent=1 // loop_header_branch
      %15 = sbr.rel (%p13) target = $region8
    $region5: #{tpu_custom_call.1} parent=1 // loop_body
      %s17 = ssub.s32 %s12, 1
      %s18 = ssub.s32 %s12, 2
      %s19 = sadd.s32 %s12, 1
      %s20 = ssub.s32 %s12, %s19
      %p21 = scmp.eq.s32.totalorder %s20, 0
      %s23 = sadd.s32 %s22, 1
      %s24 = scalar_select %p21, %s22, %s23
      %p27 = pneg %p21
      %p28 = scmp.eq.s32.totalorder %s12, 1
      %p29 = por %p27, %p28
      %p30 = scmp.ne.s32.totalorder %s22, %s25
      %p31 = scmp.eq.s32.totalorder %s12, 0
      %p32 = por %p30, %p31
      %p33 = scmp.ne.s32.totalorder %s22, %s25
      %p34 = scmp.eq.s32.totalorder %s17, 1
      %p35 = por %p33, %p34
      %p36 = scmp.ne.s32.totalorder %s25, %s26
      %p37 = scmp.eq.s32.totalorder %s17, 0
      %p38 = por %p36, %p37
      %p39 = scmp.ne.s32.totalorder %s25, %s26
      %p40 = scmp.eq.s32.totalorder %s18, 1
      %p41 = por %p39, %p40
      %p43 = scmp.ne.s32.totalorder %s26, %s42
      %p44 = scmp.eq.s32.totalorder %s18, 0
      %p45 = por %p43, %p44
      %s47 = sadd.s32 %s46, 1
      %p50 = scmp.eq.s32.totalorder %s12, 1
      %p51 = scmp.ne.s32.totalorder %s46, %s48
      %p52 = scmp.eq.s32.totalorder %s12, 0
      %p53 = por %p51, %p52
      %p54 = scmp.ne.s32.totalorder %s46, %s48
      %p55 = scmp.eq.s32.totalorder %s17, 1
      %p56 = por %p54, %p55
      %p57 = scmp.ne.s32.totalorder %s48, %s49
      %p58 = scmp.eq.s32.totalorder %s17, 0
      %p59 = por %p57, %p58
      %p60 = scmp.ne.s32.totalorder %s48, %s49
      %p61 = scmp.eq.s32.totalorder %s18, 1
      %p62 = por %p60, %p61
      %p64 = scmp.ne.s32.totalorder %s49, %s63
      %p65 = scmp.eq.s32.totalorder %s18, 0
      %p66 = por %p64, %p65
      %s68 = sadd.s32 %s67, 1
      %p71 = scmp.eq.s32.totalorder %s12, 1
      %p72 = scmp.ne.s32.totalorder %s67, %s69
      %p73 = scmp.eq.s32.totalorder %s12, 0
      %p74 = por %p72, %p73
      %p75 = scmp.ne.s32.totalorder %s67, %s69
      %p76 = scmp.eq.s32.totalorder %s17, 1
      %p77 = por %p75, %p76
      %p78 = scmp.ne.s32.totalorder %s69, %s70
      %p79 = scmp.eq.s32.totalorder %s17, 0
      %p80 = por %p78, %p79
      %p81 = scmp.ne.s32.totalorder %s69, %s70
      %p82 = scmp.eq.s32.totalorder %s18, 1
      %p83 = por %p81, %p82
      %p85 = scmp.ne.s32.totalorder %s70, %s84
      %p86 = scmp.eq.s32.totalorder %s18, 0
      %p87 = por %p85, %p86
      %s88 = ssub.s32 %s12, %s19
      %p89 = scmp.eq.s32.totalorder %s88, 0
      %s91 = sadd.s32 %s90, 1
      %s92 = scalar_select %p89, %s90, %s91
      %p95 = pneg %p89
      %p96 = scmp.eq.s32.totalorder %s12, 1
      %p97 = por %p95, %p96
      %p98 = scmp.ne.s32.totalorder %s90, %s93
      %p99 = scmp.eq.s32.totalorder %s12, 0
      %p100 = por %p98, %p99
      %p101 = scmp.ne.s32.totalorder %s90, %s93
      %p102 = scmp.eq.s32.totalorder %s17, 1
      %p103 = por %p101, %p102
      %p104 = scmp.ne.s32.totalorder %s93, %s94
      %p105 = scmp.eq.s32.totalorder %s17, 0
      %p106 = por %p104, %p105
      %p107 = scmp.ne.s32.totalorder %s93, %s94
      %p108 = scmp.eq.s32.totalorder %s18, 1
      %p109 = por %p107, %p108
      %p111 = scmp.ne.s32.totalorder %s94, %s110
      %p112 = scmp.eq.s32.totalorder %s18, 0
      %p113 = por %p111, %p112
      %p114 = scmp.le.s32.totalorder 1, %s12
      %p115 = scmp.lt.s32.totalorder %s12, 3
      %p116 = pnand %p114, %p115
      %p117 = pneg %p116
      // Predicated region
      $region9: #{tpu_custom_call.1} parent=5 // pred_check
        _
      $region10: #{tpu_custom_call.1} parent=5 // pred_check_branch
        %119 = sbr.rel (%p116) target = $region12
      $region11: #{tpu_custom_call.1} parent=5 // pred_region
        %s120 = ssub.s32 %s12, 1
        // Predicated region
        $region13: #{tpu_custom_call.1} parent=11 // pred_check
          %p121 = pneg %p59
        $region14: #{tpu_custom_call.1} parent=11 // pred_check_branch
          %123 = sbr.rel (%p121) target = $region16
        $region15: #{tpu_custom_call.1} parent=11 // pred_region
          _
        $region16: #{tpu_custom_call.1} parent=11 // pred_fallthru
          _
        // Predicated region
        $region17: #{tpu_custom_call.1} parent=11 // pred_check
          %p124 = pneg %p80
        $region18: #{tpu_custom_call.1} parent=11 // pred_check_branch
          %126 = sbr.rel (%p124) target = $region20
        $region19: #{tpu_custom_call.1} parent=11 // pred_region
          _
        $region20: #{tpu_custom_call.1} parent=11 // pred_fallthru
          _
      $region12: #{tpu_custom_call.1} parent=5 // pred_fallthru
        _
      %p127 = scmp.lt.s32.totalorder %s12, 2
      // Predicated region
      $region21: #{tpu_custom_call.1} parent=5 // pred_check
        %p128 = pneg %p127
      $region22: #{tpu_custom_call.1} parent=5 // pred_check_branch
        %130 = sbr.rel (%p128) target = $region24
      $region23: #{tpu_custom_call.1} parent=5 // pred_region
        // Predicated region
        $region25: #{tpu_custom_call.1} parent=23 // pred_check
          %p131 = pneg %p32
        $region26: #{tpu_custom_call.1} parent=23 // pred_check_branch
          %133 = sbr.rel (%p131) target = $region28
        $region27: #{tpu_custom_call.1} parent=23 // pred_region
          %s134 = smul.u32 2, %s12
          %p135 = scmp.lt.s32.totalorder %s134, 3
          %s136 = scalar_select %p135, %s134, 3
          %s137 = scalar_lea.vmem %s0, %s136
          %s138 = smul.u32 2, %s12
        $region28: #{tpu_custom_call.1} parent=23 // pred_fallthru
          _
      $region24: #{tpu_custom_call.1} parent=5 // pred_fallthru
        _
      %p139 = scmp.le.s32.totalorder 1, %s12
      %p140 = scmp.lt.s32.totalorder %s12, 3
      %p141 = pnand %p139, %p140
      %p142 = pneg %p141
      // Predicated region
      $region29: #{tpu_custom_call.1} parent=5 // pred_check
        _
      $region30: #{tpu_custom_call.1} parent=5 // pred_check_branch
        %144 = sbr.rel (%p141) target = $region32
      $region31: #{tpu_custom_call.1} parent=5 // pred_region
        %s145 = ssub.s32 %s12, 1
        %s146 = smul.u32 2, %s17
        %p147 = scmp.lt.s32.totalorder %s146, 3
        %s148 = scalar_select %p147, %s146, 3
        %s149 = scalar_lea.vmem %s0, %s148
        %p150 = pneg %p38
        %p151 = pneg %p35
        %p152 = pneg %p59
        %p153 = pneg %p56
        %p154 = pneg %p80
        %p155 = pneg %p77
        %p156 = pneg %p106
        %p157 = pneg %p103
        %s158 = sand.u32 %s93, 1
        %s159 = scalar_lea.sflag [#allocation3], %s158
        %s160 = sand.u32 %s93, 1
        %s161 = smul.addr %s160, 112
        %s162 = scalar_lea.vmem [#allocation2], %s161
        %s163 = smul.u32 2, %s17
        %p164 = scmp.lt.s32.totalorder %s163, 3
        %s165 = scalar_select %p164, %s163, 3
        %s166 = scalar_lea.vmem %s0, %s165
        %s167 = smul.u32 2, %s17
        %s168 = smul.u32 2, %s17
        %v169 = vld [vmem:[%s166] sm:$0x3]
        %v170 = vld [vmem:[%s1] sm:$0xff]
        %v171 = vld [vmem:[%s1 + $0x8] sm:$0xff]
        %v172 = vld [vmem:[%s1 + $0x10] sm:$0xff]
        %v173 = vld [vmem:[%s1 + $0x18] sm:$0xff]
        %v174 = vld [vmem:[%s1 + $0x20] sm:$0xff]
        %v175 = vld [vmem:[%s1 + $0x28] sm:$0xff]
        %v176 = vld [vmem:[%s1 + $0x30] sm:$0x3]
        %v177 = vld [vmem:[%s2] sm:$0xff]
        %v178 = vld [vmem:[%s2 + $0x8] sm:$0xff]
        %v179 = vld [vmem:[%s2 + $0x10] sm:$0xff]
        %v180 = vld [vmem:[%s2 + $0x18] sm:$0xff]
        %v181 = vld [vmem:[%s2 + $0x20] sm:$0xff]
        %v182 = vld [vmem:[%s2 + $0x28] sm:$0xff]
        %v183 = vld [vmem:[%s2 + $0x30] sm:$0x3]
        %v184 = vmul.f32 %v169, 0.62831855
        %v185 = vand.u32 2147483647, %v184
        %vm186 = vcmp.le.f32.partialorder %v185, 0.7853982
        %vm187 = vcmp.lt.s32.totalorder %v184, 0
        %v188 = vand.u32 %v184, 2139095040
        %v189 = vshrl.u32 %v188, 23
        %v190 = vsub.s32 %v189, 127
        %v191 = vand.u32 2147483647, %v184
        %v192 = vand.u32 %v191, 8388607
        %v193 = vor.u32 %v192, 8388608
        %v194 = vsub.s32 0, %v193
        %v195 = vadd.s32 %v190, 1
        %vm196 = vcmp.gt.s32.totalorder %v195, 0
        %v197 = vsel %vm196, %v195, 0
        %v198 = vshrl.u32 %v197, 5
        %v199 = vand.u32 %v197, 31
        %v200 = vsub.s32 32, %v199
        %v201 = vshrl.u32 683565275, %v200
        %v202 = vshll.u32 683565275, %v199
        %v203 = vshrl.u32 2475754826, %v200
        %v204 = vor.u32 %v202, %v203
        %v205 = vshll.u32 2475754826, %v199
        %v206 = vshrl.u32 2131351028, %v200
        %v207 = vor.u32 %v205, %v206
        %v208 = vshll.u32 2131351028, %v199
        %v209 = vshrl.u32 2102212464, %v200
        %v210 = vor.u32 %v208, %v209
        %v211 = vshll.u32 2102212464, %v199
        %v212 = vshrl.u32 920167782, %v200
        %v213 = vor.u32 %v211, %v212
        %v214 = vshll.u32 920167782, %v199
        %v215 = vshrl.u32 1326507024, %v200
        %v216 = vor.u32 %v214, %v215
        %vm217 = vcmp.lt.s32.totalorder %v198, 1
        %vm218 = vcmp.lt.s32.totalorder %v198, 2
        %vm219 = vcmp.lt.s32.totalorder %v198, 3
        %vm220 = vcmp.lt.s32.totalorder %v198, 4
        %v221 = vsel %vm217, %v201, %v204
        %v222 = vsel %vm220, %v210, 2102212464
        %v223 = vsel %vm219, %v207, %v222
        %v224 = vsel %vm218, %v221, %v223
        %v225 = vsel %vm217, %v204, %v207
        %v226 = vsel %vm220, %v213, 920167782
        %v227 = vsel %vm219, %v210, %v226
        %v228 = vsel %vm218, %v225, %v227
        %v229 = vsel %vm217, %v207, %v210
        %v230 = vsel %vm220, %v216, 1326507024
        %v231 = vsel %vm219, %v213, %v230
        %v232 = vsel %vm218, %v229, %v231
        %v233 = vshll.u32 %v193, 8
        %v234 = vand.u32 %v233, 65535
        %v235 = vshrl.u32 %v233, 16
        %v236 = vand.u32 %v232, 65535
        %v237 = vshrl.u32 %v232, 16
        %v238 = vmul.u32 %v234, %v236
        %v239 = vmul.u32 %v234, %v237
        %v240 = vmul.u32 %v235, %v236
        %v241 = vmul.u32 %v235, %v237
        %v242 = vshll.u32 %v239, 16
        %v243 = vshrl.u32 %v239, 16
        %v244 = vshll.u32 %v240, 16
        %v245 = vshrl.u32 %v240, 16
        %vm246 = vc.u32 %v238, %v242
        %v247 = vsel %vm246, 1, 0
        %v248 = vadd.s32 %v238, %v242
        %v249 = vadd.s32 %v241, %v247
        %vm250 = vc.u32 %v248, %v244
        %v251 = vsel %vm250, 1, 0
        %v252 = vadd.s32 %v248, %v244
        %v253 = vadd.s32 %v249, %v251
        %v254 = vadd.s32 %v253, %v243
        %v255 = vadd.s32 %v254, %v245
        %v256 = vand.u32 %v233, 65535
        %v257 = vshrl.u32 %v233, 16
        %v258 = vand.u32 %v228, 65535
        %v259 = vshrl.u32 %v228, 16
        %v260 = vmul.u32 %v256, %v258
        %v261 = vmul.u32 %v256, %v259
        %v262 = vmul.u32 %v257, %v258
        %v263 = vmul.u32 %v257, %v259
        %v264 = vshll.u32 %v261, 16
        %v265 = vshrl.u32 %v261, 16
        %v266 = vshll.u32 %v262, 16
        %v267 = vshrl.u32 %v262, 16
        %vm268 = vc.u32 %v260, %v264
        %v269 = vsel %vm268, 1, 0
        %v270 = vadd.s32 %v260, %v264
        %v271 = vadd.s32 %v263, %v269
        %vm272 = vc.u32 %v270, %v266
        %v273 = vsel %vm272, 1, 0
        %v274 = vadd.s32 %v270, %v266
        %v275 = vadd.s32 %v271, %v273
        %v276 = vadd.s32 %v275, %v265
        %v277 = vadd.s32 %v276, %v267
        %v278 = vmul.u32 %v233, %v224
        %v279 = vadd.s32 %v255, %v274
        %vm280 = vc.u32 %v255, %v274
        %v281 = vadd.s32 %v277, 1
        %v282 = vsel %vm280, %v281, %v277
        %v283 = vadd.s32 %v278, %v282
        %v284 = vadd.s32 %v283, 536870912
        %v285 = vshrl.u32 %v284, 30
        %v286 = vshll.u32 %v285, 30
        %v287 = vsub.s32 %v283, %v286
        %vm288 = vcmp.lt.s32.totalorder %v287, 0
        %v289 = vsub.s32 0, %v287
        %v290 = vsel %vm288, %v289, %v287
        %v291 = vclz %v290
        %v292 = vsub.s32 %v291, 2
        %vm293 = vcmp.gt.s32.totalorder 0, %v292
        %v294 = vsel %vm293, 0, %v292
        %v295 = vsub.s32 32, %v294
        %v296 = vshll.u32 %v287, %v294
        %v297 = vshrl.u32 %v279, %v295
        %v298 = vor.u32 %v296, %v297
        %v299 = vsub.s32 4294967266, %v294
        %v300 = vadd.s32 %v299, 127
        %v301 = vshll.u32 %v300, 23
        %v302 = vor.u32 4788187, %v301
        %v303 = vand.u32 2147483647, %v302
        %v305 = vcvt.s32.f32 %v298
        %v306 = vmul.f32 %v305, %v303
        %v307 = vxor.u32 %v306, 2147483648
        %v308 = vsel %vm187, %v307, %v306
        %v309 = vsub.s32 4, %v285
        %v310 = vsel %vm187, %v309, %v285
        %v311 = vsel %vm186, %v184, %v308
        %v312 = vsel %vm186, 0, %v310
        %v313 = vmul.f32 %v311, %v311
        %v314 = vmul.f32 %v313, -0.001358992
        %v315 = vadd.f32 %v314, 0.041655596
        %v316 = vmul.f32 %v313, %v315
        %v317 = vadd.f32 %v316, -0.4999988
        %v318 = vmul.f32 %v313, %v317
        %v319 = vadd.f32 1.0, %v318
        %v320 = vmul.f32 %v311, %v311
        %v321 = vmul.f32 %v320, -0.00019511016
        %v322 = vadd.f32 %v321, 0.008332121
        %v323 = vmul.f32 %v320, %v322
        %v324 = vadd.f32 %v323, -0.16666654
        %v325 = vmul.f32 %v320, %v324
        %v326 = vadd.f32 %v325, 1.0
        %v327 = vmul.f32 %v326, %v311
        %vm328 = vweird.f32 %v184
        %v329 = vand.u32 %v312, 3
        %vm330 = vcmp.lt.s32.totalorder %v329, 2
        %vm331 = vcmp.eq.s32.totalorder %v329, 0
        %v332 = vxor.u32 %v327, 2147483648
        %v333 = vsel %vm331, %v319, %v332
        %vm334 = vcmp.eq.s32.totalorder %v329, 2
        %v335 = vxor.u32 %v319, 2147483648
        %v336 = vsel %vm334, %v335, %v327
        %v337 = vsel %vm330, %v333, %v336
        %v338 = vsel %vm328, nan, %v337
        %v339 = vadd.f32 %v338, 1.0
        %v340 = vmul.f32 %v339, 0.5
        %vm341 = vcmp.lt.f32.partialorder %v169, 5.0
        %v342 = vsel %vm341, %v340, 0.0
        %v343 = vsub.f32 0.0, %v169
        %v344 = vmul.f32 %v343, 1.442695
        %v345 = vpow.pop %v344
        %v347 = vperm.slane %v345, 0
        %v348 = vperm.slane %v345, 1
        %352 = vset.pattern.permute.xlu0 0
        %353 = vperm.xlu0 %352, %v170
        %v354 = vpop.permute.xlu0 %353
        %357 = vset.pattern.permute.xlu0 0
        %358 = vperm.xlu0 %357, %v171
        %v359 = vpop.permute.xlu0 %358
        %362 = vset.pattern.permute.xlu0 0
        %363 = vperm.xlu0 %362, %v172
        %v364 = vpop.permute.xlu0 %363
        %367 = vset.pattern.permute.xlu0 0
        %368 = vperm.xlu0 %367, %v173
        %v369 = vpop.permute.xlu0 %368
        %372 = vset.pattern.permute.xlu0 0
        %373 = vperm.xlu0 %372, %v174
        %v374 = vpop.permute.xlu0 %373
        %377 = vset.pattern.permute.xlu0 0
        %378 = vperm.xlu0 %377, %v175
        %v379 = vpop.permute.xlu0 %378
        %382 = vset.pattern.permute.xlu0 0
        %383 = vperm.xlu0 %382, %v176
        %v384 = vpop.permute.xlu0 %383
        %v386 = vsub.f32 %v347, %v354
        %v387 = vsub.f32 %v348, %v354
        %v388 = vsub.f32 %v347, %v359
        %v389 = vsub.f32 %v348, %v359
        %v390 = vsub.f32 %v347, %v364
        %v391 = vsub.f32 %v348, %v364
        %v392 = vsub.f32 %v347, %v369
        %v393 = vsub.f32 %v348, %v369
        %v394 = vsub.f32 %v347, %v374
        %v395 = vsub.f32 %v348, %v374
        %v396 = vsub.f32 %v347, %v379
        %v397 = vsub.f32 %v348, %v379
        %v398 = vsub.f32 %v347, %v384
        %v399 = vsub.f32 %v348, %v384
        %v400 = vsub.f32 0.0, %v177
        %v401 = vsub.f32 0.0, %v178
        %v402 = vsub.f32 0.0, %v179
        %v403 = vsub.f32 0.0, %v180
        %v404 = vsub.f32 0.0, %v181
        %v405 = vsub.f32 0.0, %v182
        %v406 = vsub.f32 0.0, %v183
        %408 = vset.pattern.permute.xlu0 0
        %409 = vperm.xlu0 %408, %v400
        %v410 = vpop.permute.xlu0 %409
        %413 = vset.pattern.permute.xlu0 0
        %414 = vperm.xlu0 %413, %v401
        %v415 = vpop.permute.xlu0 %414
        %418 = vset.pattern.permute.xlu0 0
        %419 = vperm.xlu0 %418, %v402
        %v420 = vpop.permute.xlu0 %419
        %423 = vset.pattern.permute.xlu0 0
        %424 = vperm.xlu0 %423, %v403
        %v425 = vpop.permute.xlu0 %424
        %428 = vset.pattern.permute.xlu0 0
        %429 = vperm.xlu0 %428, %v404
        %v430 = vpop.permute.xlu0 %429
        %433 = vset.pattern.permute.xlu0 0
        %434 = vperm.xlu0 %433, %v405
        %v435 = vpop.permute.xlu0 %434
        %438 = vset.pattern.permute.xlu0 0
        %439 = vperm.xlu0 %438, %v406
        %v440 = vpop.permute.xlu0 %439
        %v442 = vmul.f32 %v410, %v386
        %v443 = vmul.f32 %v410, %v387
        %v444 = vmul.f32 %v415, %v388
        %v445 = vmul.f32 %v415, %v389
        %v446 = vmul.f32 %v420, %v390
        %v447 = vmul.f32 %v420, %v391
        %v448 = vmul.f32 %v425, %v392
        %v449 = vmul.f32 %v425, %v393
        %v450 = vmul.f32 %v430, %v394
        %v451 = vmul.f32 %v430, %v395
        %v452 = vmul.f32 %v435, %v396
        %v453 = vmul.f32 %v435, %v397
        %v454 = vmul.f32 %v440, %v398
        %v455 = vmul.f32 %v440, %v399
        %v456 = vmul.f32 %v442, %v386
        %v457 = vmul.f32 %v443, %v387
        %v458 = vmul.f32 %v444, %v388
        %v459 = vmul.f32 %v445, %v389
        %v460 = vmul.f32 %v446, %v390
        %v461 = vmul.f32 %v447, %v391
        %v462 = vmul.f32 %v448, %v392
        %v463 = vmul.f32 %v449, %v393
        %v464 = vmul.f32 %v450, %v394
        %v465 = vmul.f32 %v451, %v395
        %v466 = vmul.f32 %v452, %v396
        %v467 = vmul.f32 %v453, %v397
        %v468 = vmul.f32 %v454, %v398
        %v469 = vmul.f32 %v455, %v399
        %v470 = vmul.f32 %v456, 1.442695
        %v471 = vpow.pop %v470
        %v472 = vmul.f32 %v457, 1.442695
        %v473 = vpow.pop %v472
        %v474 = vmul.f32 %v458, 1.442695
        %v475 = vpow.pop %v474
        %v476 = vmul.f32 %v459, 1.442695
        %v477 = vpow.pop %v476
        %v478 = vmul.f32 %v460, 1.442695
        %v479 = vpow.pop %v478
        %v480 = vmul.f32 %v461, 1.442695
        %v481 = vpow.pop %v480
        %v482 = vmul.f32 %v462, 1.442695
        %v483 = vpow.pop %v482
        %v484 = vmul.f32 %v463, 1.442695
        %v485 = vpow.pop %v484
        %v486 = vmul.f32 %v464, 1.442695
        %v487 = vpow.pop %v486
        %v488 = vmul.f32 %v465, 1.442695
        %v489 = vpow.pop %v488
        %v490 = vmul.f32 %v466, 1.442695
        %v491 = vpow.pop %v490
        %v492 = vmul.f32 %v467, 1.442695
        %v493 = vpow.pop %v492
        %v494 = vmul.f32 %v468, 1.442695
        %v495 = vpow.pop %v494
        %v496 = vmul.f32 %v469, 1.442695
        %v497 = vpow.pop %v496
        %v499 = vperm.slane %v342, 0
        %v500 = vperm.slane %v342, 1
        %v503 = vmul.f32 %v499, %v471
        %v504 = vmul.f32 %v500, %v473
        %v505 = vmul.f32 %v499, %v475
        %v506 = vmul.f32 %v500, %v477
        %v507 = vmul.f32 %v499, %v479
        %v508 = vmul.f32 %v500, %v481
        %v509 = vmul.f32 %v499, %v483
        %v510 = vmul.f32 %v500, %v485
        %v511 = vmul.f32 %v499, %v487
        %v512 = vmul.f32 %v500, %v489
        %v513 = vmul.f32 %v499, %v491
        %v514 = vmul.f32 %v500, %v493
        %v515 = vmul.f32 %v499, %v495
        %v516 = vmul.f32 %v500, %v497
        %517 = vst [vmem:[%s162] sm:$0xff] %v503
        %518 = vst [vmem:[%s162 + $0x8] sm:$0xff] %v504
        %519 = vst [vmem:[%s162 + $0x10] sm:$0xff] %v505
        %520 = vst [vmem:[%s162 + $0x18] sm:$0xff] %v506
        %521 = vst [vmem:[%s162 + $0x20] sm:$0xff] %v507
        %522 = vst [vmem:[%s162 + $0x28] sm:$0xff] %v508
        %523 = vst [vmem:[%s162 + $0x30] sm:$0xff] %v509
        %524 = vst [vmem:[%s162 + $0x38] sm:$0xff] %v510
        %525 = vst [vmem:[%s162 + $0x40] sm:$0xff] %v511
        %526 = vst [vmem:[%s162 + $0x48] sm:$0xff] %v512
        %527 = vst [vmem:[%s162 + $0x50] sm:$0xff] %v513
        %528 = vst [vmem:[%s162 + $0x58] sm:$0xff] %v514
        %529 = vst [vmem:[%s162 + $0x60] sm:$0x3] %v515
        %530 = vst [vmem:[%s162 + $0x68] sm:$0x3] %v516
        %s531 = sand.u32 %s93, 1
        %s532 = scalar_lea.sflag [#allocation3], %s531
        %s533 = sand.u32 %s93, 1
        %s534 = smul.addr %s533, 112
        %s535 = scalar_lea.vmem [#allocation2], %s534
        // Predicated region
        $region33: #{tpu_custom_call.1} parent=31 // pred_check
          %p536 = pneg %p103
        $region34: #{tpu_custom_call.1} parent=31 // pred_check_branch
          %538 = sbr.rel (%p536) target = $region36
        $region35: #{tpu_custom_call.1} parent=31 // pred_region
          %s539 = smul.u32 2, %s17
          %541 = vsyncadd %s532, 0
          %s542 = smul.addr %s539, 8
          %s543 = scalar_lea.hbm %s3, %s542
          %s544 = sshll.u32 %s535, 4
          %s545 = int_to_ptr.vmem [resolvable:$true] %s544
          %s546 = sshll.u32 %s543, 4
          %s547 = int_to_ptr.hbm [resolvable:$true] %s546
          %552 = dma.vmem_to_hbm [thread:$0]  %s545, 1792, %s547, %s532, 256, 512, 16
        $region36: #{tpu_custom_call.1} parent=31 // pred_fallthru
          _
      $region32: #{tpu_custom_call.1} parent=5 // pred_fallthru
        _
      %p553 = scmp.le.s32.totalorder 2, %s12
      // Predicated region
      $region37: #{tpu_custom_call.1} parent=5 // pred_check
        %p554 = pneg %p553
      $region38: #{tpu_custom_call.1} parent=5 // pred_check_branch
        %556 = sbr.rel (%p554) target = $region40
      $region39: #{tpu_custom_call.1} parent=5 // pred_region
        %s557 = ssub.s32 %s12, 2
        // Predicated region
        $region41: #{tpu_custom_call.1} parent=39 // pred_check
          %p558 = pneg %p109
        $region42: #{tpu_custom_call.1} parent=39 // pred_check_branch
          %560 = sbr.rel (%p558) target = $region44
        $region43: #{tpu_custom_call.1} parent=39 // pred_region
          %s561 = sand.u32 %s94, 1
          %s562 = scalar_lea.sflag [#allocation3], %s561
          %s563 = sand.u32 %s94, 1
          %s564 = smul.addr %s563, 112
          %s565 = scalar_lea.vmem [#allocation2], %s564
          %567 = dma.done %s562, 1792
        $region44: #{tpu_custom_call.1} parent=39 // pred_fallthru
          _
      $region40: #{tpu_custom_call.1} parent=5 // pred_fallthru
        _
    $region6: #{tpu_custom_call.1} parent=1 // loop_footer
      %s16 = sadd.s32 1, %s12
    $region7: #{tpu_custom_call.1} parent=1 // loop_footer_branch
      %11 = sbr.rel target = $region3
    $region8: #{tpu_custom_call.1} parent=1 // loop_exit
      _
    %568 = vsyncpa [#allocation3], 1
    %s569 = scalar_lea.sflag [#allocation3], 1
    %570 = vsyncpa %s569, 1

</llo_original>
